<compile_context>
chip_gen: v7x
topology: tpu7x:2x2x1
jax: 0.10.0
libtpu: 0.0.40
codegen_flags: <defaults>
</compile_context>

<pallas_src>
import functools
import math

import jax
import jax.numpy as jnp
from jax.experimental import pallas as pl
from jax.experimental.pallas import tpu as pltpu


def _round_up(x, m):
    return ((x + m - 1) // m) * m


# ------------------------------------------------------------------ conv kernel
def _conv_relu_kernel(x_ref, w_ref, out_ref, taps_ref, *, cin, cout, kh, kw,
                      wp, out_flat, batch):
    """Fused im2col + KxK conv + bias + ReLU for the WHOLE batch, one grid step.

    x_ref:    (batch, cin, in_flat)  zero-padded images, spatial flattened over
              the padded (HP, WP) grid (plus tail zero padding), VMEM.
    w_ref:    (cout, krows) weight slab; cols 0..kh*kw*cin-1 ordered (dh,dw,ci),
              col kh*kw*cin = bias, remaining cols zero.
    out_ref:  (cout, batch*out_flat) lane-dense conv result on the flat
              padded-width grid (out_flat multiple of 128 -> unmasked stores).
    taps_ref: (krows, batch*out_flat) VMEM scratch holding the tap matrix.
    """
    lanes = batch * out_flat
    ntaps = kh * kw * cin

    # Zero the scratch so sublane-padding rows (and the bias row's neighbours)
    # contribute exactly 0 to the contraction, then write the all-ones bias row.
    taps_ref[...] = jnp.zeros_like(taps_ref)
    taps_ref[ntaps:ntaps + 1, :] = jnp.ones((1, lanes), taps_ref.dtype)

    x = x_ref[...]                                      # (batch, cin, in_flat)
    for b in range(batch):
        c0 = b * out_flat
        r = 0
        for dh in range(kh):
            for dw in range(kw):
                off = dh * wp + dw                      # uniform flat shift of this tap
                taps_ref[r:r + cin, c0:c0 + out_flat] = (
                    x[b, :, off:off + out_flat].astype(taps_ref.dtype))
                r += cin

    # Single MXU contraction (Cout, krows) x (krows, batch*out_flat) replaces
    # the previous 36 XLU-heavy broadcast-MACs.
    acc = jnp.dot(w_ref[...].astype(jnp.float32), taps_ref[...],
                  preferred_element_type=jnp.float32)
    out_ref[...] = jnp.maximum(acc, 0.0).astype(out_ref.dtype)


def conv2d_relu_pallas(x_nchw, w_slab, *, cin, cout, kh, kw):
    """Conv2d(kernel=k, stride=1, SAME padding) + bias + ReLU.  NCHW in/out.

    w_slab is the pre-packed (cout, krows) weight+bias slab (see ModelEMA)."""
    B, C, H, W = x_nchw.shape
    assert C == cin
    ph, pw = (kh - 1) // 2, (kw - 1) // 2
    HP, WP = H + 2 * ph, W + 2 * pw

    # Lane-dense flat spatial extents (multiples of 128).
    out_flat = _round_up((H - 1) * WP + W, 128)
    in_flat = _round_up(max(HP * WP, out_flat + (kh - 1) * WP + (kw - 1)), 128)
    krows = int(w_slab.shape[1])

    # Pad once (1x data — no 9x im2col in HBM) and flatten the padded grid.
    xp = jnp.pad(x_nchw, ((0, 0), (0, 0), (ph, ph), (pw, pw)))     # (B,cin,HP,WP)
    xflat = xp.reshape(B, cin, HP * WP)
    xflat = jnp.pad(xflat, ((0, 0), (0, 0), (0, in_flat - HP * WP)))

    kernel = functools.partial(_conv_relu_kernel, cin=cin, cout=cout, kh=kh,
                               kw=kw, wp=WP, out_flat=out_flat, batch=B)
    out = pl.pallas_call(
        kernel,
        out_shape=jax.ShapeDtypeStruct((cout, B * out_flat), x_nchw.dtype),
        grid=(1,),                                     # whole batch in one step
        in_specs=[
            pl.BlockSpec((B, cin, in_flat), lambda i: (0, 0, 0)),
            pl.BlockSpec((cout, krows), lambda i: (0, 0)),
        ],
        out_specs=pl.BlockSpec((cout, B * out_flat), lambda i: (0, 0)),
        scratch_shapes=[pltpu.VMEM((krows, B * out_flat), jnp.float32)],
        compiler_params=pltpu.CompilerParams(
            dimension_semantics=("arbitrary",)),
    )(xflat, w_slab)

    # Crop the flat padded-width grid back to NCHW (wrapper-side plumbing only).
    out = out.reshape(cout, B, out_flat).transpose(1, 0, 2)        # (B,cout,out_flat)
    out = out[:, :, :H * WP].reshape(B, cout, H, WP)[:, :, :, :W]
    return out


# ------------------------------------------------------------------- EMA kernel
_EMA_LANES = 128
_EMA_MAX_BLOCK_ROWS = 4096          # 4096*128*4B = 2 MiB per operand block
                                    # (3 refs x 2 buffers = 12 MiB << 32 MiB)


def _ema_update_kernel(e_ref, m_ref, decay_ref, out_ref):
    # lerp form e + (1 - d) * (m - e): robust when decay ~ 1.
    c = 1.0 - decay_ref[0]                     # runtime SMEM scalar, no recompile
    e = e_ref[...]
    out_ref[...] = e + c * (m_ref[...] - e)


def _ema_packed_layout(numel):
    """Pick the persistent (rows, 128) layout and block size once."""
    rows = _round_up(pl.cdiv(numel, _EMA_LANES), 8)
    if rows <= 8:
        block_rows = rows
    else:
        # >=2 grid steps (v7x: one per TensorCore), blocks capped at 2 MiB.
        block_rows = min(_EMA_MAX_BLOCK_ROWS, _round_up(-(-rows // 2), 8))
    rows = _round_up(rows, block_rows)
    return rows, block_rows


def ema_update_packed(ema2d, model2d, decay_arr, *, block_rows):
    rows, lanes = ema2d.shape
    total = rows * lanes
    return pl.pallas_call(
        _ema_update_kernel,
        out_shape=jax.ShapeDtypeStruct((rows, lanes), jnp.float32),
        grid=(rows // block_rows,),
        in_specs=[
            pl.BlockSpec((block_rows, lanes), lambda i: (i, 0)),
            pl.BlockSpec((block_rows, lanes), lambda i: (i, 0)),
            pl.BlockSpec(memory_space=pltpu.MemorySpace.SMEM),   # decay scalar
        ],
        out_specs=pl.BlockSpec((block_rows, lanes), lambda i: (i, 0)),
        input_output_aliases={0: 0},             # true in-place on persistent slab
        cost_estimate=pl.CostEstimate(flops=2 * total, transcendentals=0,
                                      bytes_accessed=3 * total * 4),
        compiler_params=pltpu.CompilerParams(
            dimension_semantics=("parallel",),
            vmem_limit_bytes=32 * 1024 * 1024),  # safe on v7x (64 MiB physical)
    )(ema2d, model2d, decay_arr)


def _ema_step_impl(ema2d, model_params, decay_arr, *, keys, rows, numel,
                   block_rows):
    # Only the incoming model params are packed each step; the EMA side stays
    # packed persistently.
    # TODO(synk): bf16/fp16 models would keep one packed slab per dtype to
    # avoid doubling HBM traffic; all toy params are f32 so one slab suffices.
    flat_m = jnp.concatenate(
        [jnp.ravel(model_params[k]).astype(jnp.float32) for k in keys])
    m2d = jnp.pad(flat_m, (0, rows * _EMA_LANES - numel)).reshape(rows, _EMA_LANES)
    return ema_update_packed(ema2d, m2d, decay_arr, block_rows=block_rows)


# --------------------------------------------------------------------- ModelEMA
class ModelEMA:
    """JAX/Pallas equivalent of the PyTorch ModelEMA wrapper.

    forward() runs the wrapped model (fused im2col + MXU conv + ReLU kernel);
    update_parameters() applies `e <- d*e + (1-d)*m` with one fused Pallas
    kernel over a persistent packed EMA buffer (in-place via aliasing/donation).
    """

    def __init__(self, params, decay=0.9999):
        # deepcopy analogue: JAX arrays are immutable; we own a packed copy.
        # TODO(synk): eval()/device placement bookkeeping has no Pallas
        # equivalent; the toy wrapped model has no buffers (e.g. BN stats).
        self.decay = float(decay)
        self._keys = tuple(params.keys())
        self._shapes = {k: tuple(params[k].shape) for k in self._keys}
        self._dtypes = {k: jnp.asarray(params[k]).dtype for k in self._keys}
        self._sizes = {k: int(math.prod(self._shapes[k])) for k in self._keys}
        offs, off = {}, 0
        for k in self._keys:
            offs[k] = off
            off += self._sizes[k]
        self._offsets, self._numel = offs, off

        self._rows, self._block_rows = _ema_packed_layout(self._numel)
        self._ema_flat = self._pack(params)       # persistent packed EMA state

        self._ema_step = jax.jit(
            functools.partial(_ema_step_impl, keys=self._keys, rows=self._rows,
                              numel=self._numel, block_rows=self._block_rows),
            donate_argnums=(0,))                   # donate the persistent slab

        cout, cin, kh, kw = self._shapes["conv_w"]
        self._forward = jax.jit(functools.partial(
            conv2d_relu_pallas, cin=cin, cout=cout, kh=kh, kw=kw))
        self._refresh_forward_cache()

    # -- packing helpers ---------------------------------------------------
    def _pack(self, params):
        flat = jnp.concatenate(
            [jnp.ravel(jnp.asarray(params[k])).astype(jnp.float32)
             for k in self._keys])
        flat = jnp.pad(flat, (0, self._rows * _EMA_LANES - self._numel))
        return flat.reshape(self._rows, _EMA_LANES)

    def _unpack(self):
        flat = self._ema_flat.reshape(-1)
        out = {}
        for k in self._keys:
            o, s = self._offsets[k], self._sizes[k]
            out[k] = flat[o:o + s].reshape(self._shapes[k]).astype(self._dtypes[k])
        return out

    def _refresh_forward_cache(self):
        # Cache the repacked (Cout, krows) weight slab (bias folded in as an
        # extra column) so forward() does no per-call weight transposes.
        flat = self._ema_flat.reshape(-1)
        o_w, s_w = self._offsets["conv_w"], self._sizes["conv_w"]
        o_b, s_b = self._offsets["conv_b"], self._sizes["conv_b"]
        w = flat[o_w:o_w + s_w].reshape(self._shapes["conv_w"])
        b = flat[o_b:o_b + s_b].reshape(self._shapes["conv_b"])
        cout, cin, kh, kw = self._shapes["conv_w"]
        cols = kh * kw * cin
        krows = _round_up(cols + 1, 8)
        slab = jnp.zeros((cout, krows), jnp.float32)
        slab = slab.at[:, :cols].set(
            jnp.transpose(w, (0, 2, 3, 1)).reshape(cout, cols))
        slab = slab.at[:, cols].set(b)
        self._w_slab = slab

    # -- public API ----------------------------------------------------------
    @property
    def params(self):
        return self._unpack()

    def forward(self, x):
        return self._forward(x, self._w_slab)

    __call__ = forward

    def update_parameters(self, model_params):
        decay_arr = jnp.asarray([self.decay], dtype=jnp.float32)
        self._ema_flat = self._ema_step(self._ema_flat, dict(model_params),
                                        decay_arr)
        self._refresh_forward_cache()

    def state_dict(self):
        return self._unpack()

    def load_state_dict(self, state_dict):
        self._ema_flat = self._pack(state_dict)
        self._refresh_forward_cache()


# ------------------------------------------------------------------------ main
if __name__ == "__main__":
    key = jax.random.PRNGKey(0)
    k_x, k_w, k_b, k_w2, k_b2 = jax.random.split(key, 5)

    B, Cin, H, W = 2, 4, 16, 16
    Cout, KH, KW = 8, 3, 3

    ema_params = {
        "conv_w": jax.random.normal(k_w, (Cout, Cin, KH, KW), jnp.float32) * 0.1,
        "conv_b": jax.random.normal(k_b, (Cout,), jnp.float32) * 0.1,
    }
    train_params = {
        "conv_w": jax.random.normal(k_w2, (Cout, Cin, KH, KW), jnp.float32) * 0.1,
        "conv_b": jax.random.normal(k_b2, (Cout,), jnp.float32) * 0.1,
    }

    x = jax.random.normal(k_x, (B, Cin, H, W), jnp.float32)

    ema = ModelEMA(ema_params, decay=0.9999)

    # ---- forward (fused im2col + MXU conv + bias + ReLU Pallas kernel) ----
    y = ema(x)
    y = jax.block_until_ready(y)

    y_ref = jax.lax.conv_general_dilated(
        x, ema_params["conv_w"], window_strides=(1, 1), padding="SAME",
        dimension_numbers=("NCHW", "OIHW", "NCHW"),
        precision=jax.lax.Precision.HIGHEST,
    ) + ema_params["conv_b"].reshape(1, Cout, 1, 1)
    y_ref = jnp.maximum(y_ref, 0.0)
    assert y.shape == (B, Cout, H, W)
    assert jnp.allclose(y, y_ref, atol=5e-3, rtol=5e-3), \
        float(jnp.max(jnp.abs(y - y_ref)))

    # ---- update_parameters (single fused, in-place Pallas EMA call) ----
    ema.update_parameters(train_params)
    new_params = ema.state_dict()
    jax.block_until_ready(new_params["conv_w"])
    for k in ema_params:
        ref = 0.9999 * ema_params[k] + (1.0 - 0.9999) * train_params[k]
        assert jnp.allclose(new_params[k], ref, atol=1e-6, rtol=1e-6)

    print("KERNEL_OK")
</pallas_src>

<mosaic_0001>
module attributes {stable_mosaic.version = 11 : i64} {
  func.func @_conv_relu_kernel(%arg0: i32, %arg1: memref<2x4x512xf32, #tpu.memory_space<vmem>>, %arg2: memref<8x40xf32, #tpu.memory_space<vmem>>, %arg3: memref<8x768xf32, #tpu.memory_space<vmem>>, %arg4: memref<40x768xf32, #tpu.memory_space<vmem>>) attributes {dimension_semantics = [#tpu.dimension_semantics<arbitrary>], iteration_bounds = array<i64: 1>, scalar_prefetch = 0 : i64, scratch_operands = 1 : i64, tpu.core_type = #tpu.core_type<tc>, window_params = [{pipeline_mode = #tpu.pipeline_mode<synchronous>, transform_indices = @transform_0, window_bounds = array<i64: 2, 4, 512>}, {pipeline_mode = #tpu.pipeline_mode<synchronous>, transform_indices = @transform_1, window_bounds = array<i64: 8, 40>}, {pipeline_mode = #tpu.pipeline_mode<synchronous>, transform_indices = @transform_2, window_bounds = array<i64: 8, 768>}]} {
    %cst = arith.constant 0.000000e+00 : f32
    %0 = vector.broadcast %cst : f32 to vector<40x768xf32>
    %c0 = arith.constant 0 : index
    %c0_0 = arith.constant 0 : index
    %1 = vector.load %arg4[%c0, %c0_0] : memref<40x768xf32, #tpu.memory_space<vmem>>, vector<40x768xf32>
    tpu.vector_store %arg4[%c0, %c0_0], %0 {strides = array<i32>} : memref<40x768xf32, #tpu.memory_space<vmem>>, vector<40x768xf32>,
    %cst_1 = arith.constant 1.000000e+00 : f32
    %2 = vector.broadcast %cst_1 : f32 to vector<1x768xf32>
    %c36 = arith.constant 36 : index
    %c0_2 = arith.constant 0 : index
    %3 = vector.load %arg4[%c36, %c0_2] : memref<40x768xf32, #tpu.memory_space<vmem>>, vector<1x768xf32>
    tpu.vector_store %arg4[%c36, %c0_2], %2 {strides = array<i32>} : memref<40x768xf32, #tpu.memory_space<vmem>>, vector<1x768xf32>,
    %c0_3 = arith.constant 0 : index
    %c0_4 = arith.constant 0 : index
    %c0_5 = arith.constant 0 : index
    %4 = vector.load %arg1[%c0_3, %c0_4, %c0_5] : memref<2x4x512xf32, #tpu.memory_space<vmem>>, vector<2x4x512xf32>
    %5 = vector.extract_strided_slice %4 {offsets = [0, 0, 0], sizes = [1, 4, 384], strides = [1, 1, 1]} : vector<2x4x512xf32> to vector<1x4x384xf32>
    %6 = vector.shape_cast %5 : vector<1x4x384xf32> to vector<4x384xf32>
    %c0_6 = arith.constant 0 : index
    %c0_7 = arith.constant 0 : index
    %7 = vector.load %arg4[%c0_6, %c0_7] : memref<40x768xf32, #tpu.memory_space<vmem>>, vector<4x384xf32>
    tpu.vector_store %arg4[%c0_6, %c0_7], %6 {strides = array<i32>} : memref<40x768xf32, #tpu.memory_space<vmem>>, vector<4x384xf32>,
    %8 = vector.extract_strided_slice %4 {offsets = [0, 0, 1], sizes = [1, 4, 384], strides = [1, 1, 1]} : vector<2x4x512xf32> to vector<1x4x384xf32>
    %9 = vector.shape_cast %8 : vector<1x4x384xf32> to vector<4x384xf32>
    %c4 = arith.constant 4 : index
    %c0_8 = arith.constant 0 : index
    %10 = vector.load %arg4[%c4, %c0_8] : memref<40x768xf32, #tpu.memory_space<vmem>>, vector<4x384xf32>
    tpu.vector_store %arg4[%c4, %c0_8], %9 {strides = array<i32>} : memref<40x768xf32, #tpu.memory_space<vmem>>, vector<4x384xf32>,
    %11 = vector.extract_strided_slice %4 {offsets = [0, 0, 2], sizes = [1, 4, 384], strides = [1, 1, 1]} : vector<2x4x512xf32> to vector<1x4x384xf32>
    %12 = vector.shape_cast %11 : vector<1x4x384xf32> to vector<4x384xf32>
    %c8 = arith.constant 8 : index
    %c0_9 = arith.constant 0 : index
    %13 = vector.load %arg4[%c8, %c0_9] : memref<40x768xf32, #tpu.memory_space<vmem>>, vector<4x384xf32>
    tpu.vector_store %arg4[%c8, %c0_9], %12 {strides = array<i32>} : memref<40x768xf32, #tpu.memory_space<vmem>>, vector<4x384xf32>,
    %14 = vector.extract_strided_slice %4 {offsets = [0, 0, 18], sizes = [1, 4, 384], strides = [1, 1, 1]} : vector<2x4x512xf32> to vector<1x4x384xf32>
    %15 = vector.shape_cast %14 : vector<1x4x384xf32> to vector<4x384xf32>
    %c12 = arith.constant 12 : index
    %c0_10 = arith.constant 0 : index
    %16 = vector.load %arg4[%c12, %c0_10] : memref<40x768xf32, #tpu.memory_space<vmem>>, vector<4x384xf32>
    tpu.vector_store %arg4[%c12, %c0_10], %15 {strides = array<i32>} : memref<40x768xf32, #tpu.memory_space<vmem>>, vector<4x384xf32>,
    %17 = vector.extract_strided_slice %4 {offsets = [0, 0, 19], sizes = [1, 4, 384], strides = [1, 1, 1]} : vector<2x4x512xf32> to vector<1x4x384xf32>
    %18 = vector.shape_cast %17 : vector<1x4x384xf32> to vector<4x384xf32>
    %c16 = arith.constant 16 : index
    %c0_11 = arith.constant 0 : index
    %19 = vector.load %arg4[%c16, %c0_11] : memref<40x768xf32, #tpu.memory_space<vmem>>, vector<4x384xf32>
    tpu.vector_store %arg4[%c16, %c0_11], %18 {strides = array<i32>} : memref<40x768xf32, #tpu.memory_space<vmem>>, vector<4x384xf32>,
    %20 = vector.extract_strided_slice %4 {offsets = [0, 0, 20], sizes = [1, 4, 384], strides = [1, 1, 1]} : vector<2x4x512xf32> to vector<1x4x384xf32>
    %21 = vector.shape_cast %20 : vector<1x4x384xf32> to vector<4x384xf32>
    %c20 = arith.constant 20 : index
    %c0_12 = arith.constant 0 : index
    %22 = vector.load %arg4[%c20, %c0_12] : memref<40x768xf32, #tpu.memory_space<vmem>>, vector<4x384xf32>
    tpu.vector_store %arg4[%c20, %c0_12], %21 {strides = array<i32>} : memref<40x768xf32, #tpu.memory_space<vmem>>, vector<4x384xf32>,
    %23 = vector.extract_strided_slice %4 {offsets = [0, 0, 36], sizes = [1, 4, 384], strides = [1, 1, 1]} : vector<2x4x512xf32> to vector<1x4x384xf32>
    %24 = vector.shape_cast %23 : vector<1x4x384xf32> to vector<4x384xf32>
    %c24 = arith.constant 24 : index
    %c0_13 = arith.constant 0 : index
    %25 = vector.load %arg4[%c24, %c0_13] : memref<40x768xf32, #tpu.memory_space<vmem>>, vector<4x384xf32>
    tpu.vector_store %arg4[%c24, %c0_13], %24 {strides = array<i32>} : memref<40x768xf32, #tpu.memory_space<vmem>>, vector<4x384xf32>,
    %26 = vector.extract_strided_slice %4 {offsets = [0, 0, 37], sizes = [1, 4, 384], strides = [1, 1, 1]} : vector<2x4x512xf32> to vector<1x4x384xf32>
    %27 = vector.shape_cast %26 : vector<1x4x384xf32> to vector<4x384xf32>
    %c28 = arith.constant 28 : index
    %c0_14 = arith.constant 0 : index
    %28 = vector.load %arg4[%c28, %c0_14] : memref<40x768xf32, #tpu.memory_space<vmem>>, vector<4x384xf32>
    tpu.vector_store %arg4[%c28, %c0_14], %27 {strides = array<i32>} : memref<40x768xf32, #tpu.memory_space<vmem>>, vector<4x384xf32>,
    %29 = vector.extract_strided_slice %4 {offsets = [0, 0, 38], sizes = [1, 4, 384], strides = [1, 1, 1]} : vector<2x4x512xf32> to vector<1x4x384xf32>
    %30 = vector.shape_cast %29 : vector<1x4x384xf32> to vector<4x384xf32>
    %c32 = arith.constant 32 : index
    %c0_15 = arith.constant 0 : index
    %31 = vector.load %arg4[%c32, %c0_15] : memref<40x768xf32, #tpu.memory_space<vmem>>, vector<4x384xf32>
    tpu.vector_store %arg4[%c32, %c0_15], %30 {strides = array<i32>} : memref<40x768xf32, #tpu.memory_space<vmem>>, vector<4x384xf32>,
    %32 = vector.extract_strided_slice %4 {offsets = [1, 0, 0], sizes = [1, 4, 384], strides = [1, 1, 1]} : vector<2x4x512xf32> to vector<1x4x384xf32>
    %33 = vector.shape_cast %32 : vector<1x4x384xf32> to vector<4x384xf32>
    %c0_16 = arith.constant 0 : index
    %c384 = arith.constant 384 : index
    %34 = vector.load %arg4[%c0_16, %c384] : memref<40x768xf32, #tpu.memory_space<vmem>>, vector<4x384xf32>
    tpu.vector_store %arg4[%c0_16, %c384], %33 {strides = array<i32>} : memref<40x768xf32, #tpu.memory_space<vmem>>, vector<4x384xf32>,
    %35 = vector.extract_strided_slice %4 {offsets = [1, 0, 1], sizes = [1, 4, 384], strides = [1, 1, 1]} : vector<2x4x512xf32> to vector<1x4x384xf32>
    %36 = vector.shape_cast %35 : vector<1x4x384xf32> to vector<4x384xf32>
    %c4_17 = arith.constant 4 : index
    %c384_18 = arith.constant 384 : index
    %37 = vector.load %arg4[%c4_17, %c384_18] : memref<40x768xf32, #tpu.memory_space<vmem>>, vector<4x384xf32>
    tpu.vector_store %arg4[%c4_17, %c384_18], %36 {strides = array<i32>} : memref<40x768xf32, #tpu.memory_space<vmem>>, vector<4x384xf32>,
    %38 = vector.extract_strided_slice %4 {offsets = [1, 0, 2], sizes = [1, 4, 384], strides = [1, 1, 1]} : vector<2x4x512xf32> to vector<1x4x384xf32>
    %39 = vector.shape_cast %38 : vector<1x4x384xf32> to vector<4x384xf32>
    %c8_19 = arith.constant 8 : index
    %c384_20 = arith.constant 384 : index
    %40 = vector.load %arg4[%c8_19, %c384_20] : memref<40x768xf32, #tpu.memory_space<vmem>>, vector<4x384xf32>
    tpu.vector_store %arg4[%c8_19, %c384_20], %39 {strides = array<i32>} : memref<40x768xf32, #tpu.memory_space<vmem>>, vector<4x384xf32>,
    %41 = vector.extract_strided_slice %4 {offsets = [1, 0, 18], sizes = [1, 4, 384], strides = [1, 1, 1]} : vector<2x4x512xf32> to vector<1x4x384xf32>
    %42 = vector.shape_cast %41 : vector<1x4x384xf32> to vector<4x384xf32>
    %c12_21 = arith.constant 12 : index
    %c384_22 = arith.constant 384 : index
    %43 = vector.load %arg4[%c12_21, %c384_22] : memref<40x768xf32, #tpu.memory_space<vmem>>, vector<4x384xf32>
    tpu.vector_store %arg4[%c12_21, %c384_22], %42 {strides = array<i32>} : memref<40x768xf32, #tpu.memory_space<vmem>>, vector<4x384xf32>,
    %44 = vector.extract_strided_slice %4 {offsets = [1, 0, 19], sizes = [1, 4, 384], strides = [1, 1, 1]} : vector<2x4x512xf32> to vector<1x4x384xf32>
    %45 = vector.shape_cast %44 : vector<1x4x384xf32> to vector<4x384xf32>
    %c16_23 = arith.constant 16 : index
    %c384_24 = arith.constant 384 : index
    %46 = vector.load %arg4[%c16_23, %c384_24] : memref<40x768xf32, #tpu.memory_space<vmem>>, vector<4x384xf32>
    tpu.vector_store %arg4[%c16_23, %c384_24], %45 {strides = array<i32>} : memref<40x768xf32, #tpu.memory_space<vmem>>, vector<4x384xf32>,
    %47 = vector.extract_strided_slice %4 {offsets = [1, 0, 20], sizes = [1, 4, 384], strides = [1, 1, 1]} : vector<2x4x512xf32> to vector<1x4x384xf32>
    %48 = vector.shape_cast %47 : vector<1x4x384xf32> to vector<4x384xf32>
    %c20_25 = arith.constant 20 : index
    %c384_26 = arith.constant 384 : index
    %49 = vector.load %arg4[%c20_25, %c384_26] : memref<40x768xf32, #tpu.memory_space<vmem>>, vector<4x384xf32>
    tpu.vector_store %arg4[%c20_25, %c384_26], %48 {strides = array<i32>} : memref<40x768xf32, #tpu.memory_space<vmem>>, vector<4x384xf32>,
    %50 = vector.extract_strided_slice %4 {offsets = [1, 0, 36], sizes = [1, 4, 384], strides = [1, 1, 1]} : vector<2x4x512xf32> to vector<1x4x384xf32>
    %51 = vector.shape_cast %50 : vector<1x4x384xf32> to vector<4x384xf32>
    %c24_27 = arith.constant 24 : index
    %c384_28 = arith.constant 384 : index
    %52 = vector.load %arg4[%c24_27, %c384_28] : memref<40x768xf32, #tpu.memory_space<vmem>>, vector<4x384xf32>
    tpu.vector_store %arg4[%c24_27, %c384_28], %51 {strides = array<i32>} : memref<40x768xf32, #tpu.memory_space<vmem>>, vector<4x384xf32>,
    %53 = vector.extract_strided_slice %4 {offsets = [1, 0, 37], sizes = [1, 4, 384], strides = [1, 1, 1]} : vector<2x4x512xf32> to vector<1x4x384xf32>
    %54 = vector.shape_cast %53 : vector<1x4x384xf32> to vector<4x384xf32>
    %c28_29 = arith.constant 28 : index
    %c384_30 = arith.constant 384 : index
    %55 = vector.load %arg4[%c28_29, %c384_30] : memref<40x768xf32, #tpu.memory_space<vmem>>, vector<4x384xf32>
    tpu.vector_store %arg4[%c28_29, %c384_30], %54 {strides = array<i32>} : memref<40x768xf32, #tpu.memory_space<vmem>>, vector<4x384xf32>,
    %56 = vector.extract_strided_slice %4 {offsets = [1, 0, 38], sizes = [1, 4, 384], strides = [1, 1, 1]} : vector<2x4x512xf32> to vector<1x4x384xf32>
    %57 = vector.shape_cast %56 : vector<1x4x384xf32> to vector<4x384xf32>
    %c32_31 = arith.constant 32 : index
    %c384_32 = arith.constant 384 : index
    %58 = vector.load %arg4[%c32_31, %c384_32] : memref<40x768xf32, #tpu.memory_space<vmem>>, vector<4x384xf32>
    tpu.vector_store %arg4[%c32_31, %c384_32], %57 {strides = array<i32>} : memref<40x768xf32, #tpu.memory_space<vmem>>, vector<4x384xf32>,
    %c0_33 = arith.constant 0 : index
    %c0_34 = arith.constant 0 : index
    %59 = vector.load %arg2[%c0_33, %c0_34] : memref<8x40xf32, #tpu.memory_space<vmem>>, vector<8x40xf32>
    %c0_35 = arith.constant 0 : index
    %c0_36 = arith.constant 0 : index
    %60 = vector.load %arg4[%c0_35, %c0_36] : memref<40x768xf32, #tpu.memory_space<vmem>>, vector<40x768xf32>
    %cst_37 = arith.constant dense<0.000000e+00> : vector<8x768xf32>
    %61 = tpu.matmul %59, %60, %cst_37 {dimension_numbers = #tpu.dot_dimension_numbers<[1], [0], [0], [1], [0, 0, 1, 1], [], []>} : vector<8x40xf32>, vector<40x768xf32>, vector<8x768xf32> -> vector<8x768xf32>
    %cst_38 = arith.constant 0.000000e+00 : f32
    %62 = vector.broadcast %cst_38 : f32 to vector<8x768xf32>
    %63 = arith.maximumf %61, %62 : vector<8x768xf32>
    %c0_39 = arith.constant 0 : index
    %c0_40 = arith.constant 0 : index
    %64 = vector.load %arg3[%c0_39, %c0_40] : memref<8x768xf32, #tpu.memory_space<vmem>>, vector<8x768xf32>
    tpu.vector_store %arg3[%c0_39, %c0_40], %63 {strides = array<i32>} : memref<8x768xf32, #tpu.memory_space<vmem>>, vector<8x768xf32>,
    return
  }
  func.func @transform_0(%arg0: i32) -> (i32, i32, i32) {
    %c0_i32 = arith.constant 0 : i32
    %c0_i32_0 = arith.constant 0 : i32
    %c0_i32_1 = arith.constant 0 : i32
    %c0_i32_2 = arith.constant 0 : i32
    return %c0_i32, %c0_i32_0, %c0_i32_1 : i32, i32, i32
  }
  func.func @transform_1(%arg0: i32) -> (i32, i32) {
    %c0_i32 = arith.constant 0 : i32
    %c0_i32_0 = arith.constant 0 : i32
    %c0_i32_1 = arith.constant 0 : i32
    return %c0_i32, %c0_i32_0 : i32, i32
  }
  func.func @transform_2(%arg0: i32) -> (i32, i32) {
    %c0_i32 = arith.constant 0 : i32
    %c0_i32_0 = arith.constant 0 : i32
    %c0_i32_1 = arith.constant 0 : i32
    return %c0_i32, %c0_i32_0 : i32, i32
  }
}

</mosaic_0001>

<llo_original>
// kernel: conv2d_relu_pallas.1
$region0: #{conv2d_relu_pallas.1}
  #allocation0 [shape = 'u32[]', space=smem, size = 0x4, offset = 0x4, fixed_abs, tag = 'smem constant byte address 0x4 - core index']
  #allocation1 [shape = 'u32[144,128]{1,0:T(1,128)}', space=vmem, size = 0x12000, scoped, tag = 'internal scratch']
  #allocation2 [shape = 'f32[40,768]{1,0:T(8,128)}', space=vmem, size = 0x1e000, scoped, tag = 'scratch operand']
  %s0 = inlined_call_operand.vmem [shape: f32[2,4,512], index: 0, kind: input, shape index: {}]
  %s1 = inlined_call_operand.vmem [shape: f32[8,40], index: 1, kind: input, shape index: {}]
  %s2 = inlined_call_operand.vmem [shape: f32[8,768], index: 2, kind: output, shape index: {}]
  %s3 = sld [smem:[#allocation0]]
  $region18: #{conv2d_relu_pallas.1} parent=0
    _
  %s5 = ssub.s32 1, %s3
  %s6 = scalar_select 0, %s5, %s3
  // Predicated region
  $region2: #{conv2d_relu_pallas.1} parent=0 // pred_check
    _
  $region3: #{conv2d_relu_pallas.1} parent=0 // pred_check_branch
    %8 = sbr.rel (0) target = $region5
  $region4: #{conv2d_relu_pallas.1} parent=0 // pred_region
    _
  $region5: #{conv2d_relu_pallas.1} parent=0 // pred_fallthru
    _
  // Predicated region
  $region6: #{conv2d_relu_pallas.1} parent=0 // pred_check
    _
  $region7: #{conv2d_relu_pallas.1} parent=0 // pred_check_branch
    %10 = sbr.rel (0) target = $region9
  $region8: #{conv2d_relu_pallas.1} parent=0 // pred_region
    _
  $region9: #{conv2d_relu_pallas.1} parent=0 // pred_fallthru
    _
  %11 = vst [vmem:[#allocation2] sm:$0xff] 0.0
  %12 = vst [vmem:[#allocation2 + $0x8] sm:$0xff] 0.0
  %13 = vst [vmem:[#allocation2 + $0x10] sm:$0xff] 0.0
  %14 = vst [vmem:[#allocation2 + $0x18] sm:$0xff] 0.0
  %15 = vst [vmem:[#allocation2 + $0x20] sm:$0xff] 0.0
  %16 = vst [vmem:[#allocation2 + $0x28] sm:$0xff] 0.0
  %17 = vst [vmem:[#allocation2 + $0x30] sm:$0xff] 0.0
  %18 = vst [vmem:[#allocation2 + $0x38] sm:$0xff] 0.0
  %19 = vst [vmem:[#allocation2 + $0x40] sm:$0xff] 0.0
  %20 = vst [vmem:[#allocation2 + $0x48] sm:$0xff] 0.0
  %21 = vst [vmem:[#allocation2 + $0x50] sm:$0xff] 0.0
  %22 = vst [vmem:[#allocation2 + $0x58] sm:$0xff] 0.0
  %23 = vst [vmem:[#allocation2 + $0x60] sm:$0xff] 0.0
  %24 = vst [vmem:[#allocation2 + $0x68] sm:$0xff] 0.0
  %25 = vst [vmem:[#allocation2 + $0x70] sm:$0xff] 0.0
  %26 = vst [vmem:[#allocation2 + $0x78] sm:$0xff] 0.0
  %27 = vst [vmem:[#allocation2 + $0x80] sm:$0xff] 0.0
  %28 = vst [vmem:[#allocation2 + $0x88] sm:$0xff] 0.0
  %29 = vst [vmem:[#allocation2 + $0x90] sm:$0xff] 0.0
  %30 = vst [vmem:[#allocation2 + $0x98] sm:$0xff] 0.0
  %31 = vst [vmem:[#allocation2 + $0xa0] sm:$0xff] 0.0
  %32 = vst [vmem:[#allocation2 + $0xa8] sm:$0xff] 0.0
  %33 = vst [vmem:[#allocation2 + $0xb0] sm:$0xff] 0.0
  %34 = vst [vmem:[#allocation2 + $0xb8] sm:$0xff] 0.0
  %35 = vst [vmem:[#allocation2 + $0xc0] sm:$0xff] 0.0
  %36 = vst [vmem:[#allocation2 + $0xc8] sm:$0xff] 0.0
  %37 = vst [vmem:[#allocation2 + $0xd0] sm:$0xff] 0.0
  %38 = vst [vmem:[#allocation2 + $0xd8] sm:$0xff] 0.0
  %39 = vst [vmem:[#allocation2 + $0xe0] sm:$0xff] 0.0
  %40 = vst [vmem:[#allocation2 + $0xe8] sm:$0xff] 0.0
  %v41 = vlaneseq
  %vm42 = vcmp.ge.s32.totalorder %v41, 0
  %vm43 = vcmp.lt.s32.totalorder %v41, 768
  %vm44 = vmand %vm42, %vm43
  %s45 = scalar_lea.vmem [#allocation2], 196
  %46 = vst.msk [vmem:[%s45] ss:$8 sm:$0xf] %vm44, 1.0
  %47 = vst.msk [vmem:[%s45] ss:$8 sm:$0x30] %vm44, 1.0
  %v48 = vld [vmem:[%s0] sm:$0xff]
  %v49 = vld [vmem:[%s0 + $0x8] sm:$0xff]
  %v50 = vld [vmem:[%s0 + $0x10] sm:$0xff]
  %v51 = vld [vmem:[%s0 + $0x18] sm:$0xff]
  %v54 = vcombine.high %v48, %v48
  %56 = vst [vmem:[#allocation2] sm:$0xf] %v48
  %57 = vst [vmem:[#allocation2 + $0x8] sm:$0xf] %v54
  %58 = vst [vmem:[#allocation2 + $0x10] sm:$0xf] %v49
  %v59 = vcombine.low %v48, %v48
  %v60 = vcombine.low %v49, %v49
  %61 = vrot.lane.b32.xlu0 %v59, 127
  %v62 = vpop.permute.xlu0 %61
  %63 = vrot.lane.b32.xlu0 %v48, 127
  %v64 = vpop.permute.xlu0 %63
  %65 = vrot.lane.b32.xlu0 %v60, 127
  %v66 = vpop.permute.xlu0 %65
  %67 = vrot.lane.b32.xlu0 %v49, 127
  %v68 = vpop.permute.xlu0 %67
  %vm69 = vcmask 1039360
  %v70 = vsel %vm69, %v62, %v64
  %v71 = vsel %vm69, %v64, %v66
  %v72 = vsel %vm69, %v66, %v68
  %76 = vst [vmem:[#allocation2] sm:$0xf0] %v70
  %77 = vst [vmem:[#allocation2 + $0x8] sm:$0xf0] %v71
  %78 = vst [vmem:[#allocation2 + $0x10] sm:$0xf0] %v72
  %v79 = vcombine.high %v49, %v49
  %80 = vrot.lane.b32.xlu0 %v48, 126
  %v81 = vpop.permute.xlu0 %80
  %82 = vrot.lane.b32.xlu0 %v54, 126
  %v83 = vpop.permute.xlu0 %82
  %84 = vrot.lane.b32.xlu0 %v49, 126
  %v85 = vpop.permute.xlu0 %84
  %86 = vrot.lane.b32.xlu0 %v79, 126
  %v87 = vpop.permute.xlu0 %86
  %vm88 = vcmask 1031168
  %v89 = vsel %vm88, %v81, %v83
  %v90 = vsel %vm88, %v83, %v85
  %v91 = vsel %vm88, %v85, %v87
  %95 = vst [vmem:[#allocation2 + $0x30] sm:$0xf] %v89
  %96 = vst [vmem:[#allocation2 + $0x38] sm:$0xf] %v90
  %97 = vst [vmem:[#allocation2 + $0x40] sm:$0xf] %v91
  %98 = vrot.lane.b32.xlu0 %v59, 110
  %v99 = vpop.permute.xlu0 %98
  %100 = vrot.lane.b32.xlu0 %v48, 110
  %v101 = vpop.permute.xlu0 %100
  %102 = vrot.lane.b32.xlu0 %v60, 110
  %v103 = vpop.permute.xlu0 %102
  %104 = vrot.lane.b32.xlu0 %v49, 110
  %v105 = vpop.permute.xlu0 %104
  %vm106 = vcmask 900096
  %v107 = vsel %vm106, %v99, %v101
  %v108 = vsel %vm106, %v101, %v103
  %v109 = vsel %vm106, %v103, %v105
  %113 = vst [vmem:[#allocation2 + $0x30] sm:$0xf0] %v107
  %114 = vst [vmem:[#allocation2 + $0x38] sm:$0xf0] %v108
  %115 = vst [vmem:[#allocation2 + $0x40] sm:$0xf0] %v109
  %116 = vrot.lane.b32.xlu0 %v48, 109
  %v117 = vpop.permute.xlu0 %116
  %118 = vrot.lane.b32.xlu0 %v54, 109
  %v119 = vpop.permute.xlu0 %118
  %120 = vrot.lane.b32.xlu0 %v49, 109
  %v121 = vpop.permute.xlu0 %120
  %122 = vrot.lane.b32.xlu0 %v79, 109
  %v123 = vpop.permute.xlu0 %122
  %vm124 = vcmask 891904
  %v125 = vsel %vm124, %v117, %v119
  %v126 = vsel %vm124, %v119, %v121
  %v127 = vsel %vm124, %v121, %v123
  %131 = vst [vmem:[#allocation2 + $0x60] sm:$0xf] %v125
  %132 = vst [vmem:[#allocation2 + $0x68] sm:$0xf] %v126
  %133 = vst [vmem:[#allocation2 + $0x70] sm:$0xf] %v127
  %134 = vrot.lane.b32.xlu0 %v59, 108
  %v135 = vpop.permute.xlu0 %134
  %136 = vrot.lane.b32.xlu0 %v48, 108
  %v137 = vpop.permute.xlu0 %136
  %138 = vrot.lane.b32.xlu0 %v60, 108
  %v139 = vpop.permute.xlu0 %138
  %140 = vrot.lane.b32.xlu0 %v49, 108
  %v141 = vpop.permute.xlu0 %140
  %vm142 = vcmask 883712
  %v143 = vsel %vm142, %v135, %v137
  %v144 = vsel %vm142, %v137, %v139
  %v145 = vsel %vm142, %v139, %v141
  %149 = vst [vmem:[#allocation2 + $0x60] sm:$0xf0] %v143
  %150 = vst [vmem:[#allocation2 + $0x68] sm:$0xf0] %v144
  %151 = vst [vmem:[#allocation2 + $0x70] sm:$0xf0] %v145
  %152 = vrot.lane.b32.xlu0 %v48, 92
  %v153 = vpop.permute.xlu0 %152
  %154 = vrot.lane.b32.xlu0 %v54, 92
  %v155 = vpop.permute.xlu0 %154
  %156 = vrot.lane.b32.xlu0 %v49, 92
  %v157 = vpop.permute.xlu0 %156
  %158 = vrot.lane.b32.xlu0 %v79, 92
  %v159 = vpop.permute.xlu0 %158
  %vm160 = vcmask 752640
  %v161 = vsel %vm160, %v153, %v155
  %v162 = vsel %vm160, %v155, %v157
  %v163 = vsel %vm160, %v157, %v159
  %167 = vst [vmem:[#allocation2 + $0x90] sm:$0xf] %v161
  %168 = vst [vmem:[#allocation2 + $0x98] sm:$0xf] %v162
  %169 = vst [vmem:[#allocation2 + $0xa0] sm:$0xf] %v163
  %170 = vrot.lane.b32.xlu0 %v59, 91
  %v171 = vpop.permute.xlu0 %170
  %172 = vrot.lane.b32.xlu0 %v48, 91
  %v173 = vpop.permute.xlu0 %172
  %174 = vrot.lane.b32.xlu0 %v60, 91
  %v175 = vpop.permute.xlu0 %174
  %176 = vrot.lane.b32.xlu0 %v49, 91
  %v177 = vpop.permute.xlu0 %176
  %vm178 = vcmask 744448
  %v179 = vsel %vm178, %v171, %v173
  %v180 = vsel %vm178, %v173, %v175
  %v181 = vsel %vm178, %v175, %v177
  %185 = vst [vmem:[#allocation2 + $0x90] sm:$0xf0] %v179
  %186 = vst [vmem:[#allocation2 + $0x98] sm:$0xf0] %v180
  %187 = vst [vmem:[#allocation2 + $0xa0] sm:$0xf0] %v181
  %188 = vrot.lane.b32.xlu0 %v48, 90
  %v189 = vpop.permute.xlu0 %188
  %190 = vrot.lane.b32.xlu0 %v54, 90
  %v191 = vpop.permute.xlu0 %190
  %192 = vrot.lane.b32.xlu0 %v49, 90
  %v193 = vpop.permute.xlu0 %192
  %194 = vrot.lane.b32.xlu0 %v79, 90
  %v195 = vpop.permute.xlu0 %194
  %vm196 = vcmask 736256
  %v197 = vsel %vm196, %v189, %v191
  %v198 = vsel %vm196, %v191, %v193
  %v199 = vsel %vm196, %v193, %v195
  %203 = vst [vmem:[#allocation2 + $0xc0] sm:$0xf] %v197
  %204 = vst [vmem:[#allocation2 + $0xc8] sm:$0xf] %v198
  %205 = vst [vmem:[#allocation2 + $0xd0] sm:$0xf] %v199
  %v208 = vcombine.high %v50, %v50
  %210 = vst [vmem:[#allocation2 + $0x18] sm:$0xf] %v50
  %211 = vst [vmem:[#allocation2 + $0x20] sm:$0xf] %v208
  %212 = vst [vmem:[#allocation2 + $0x28] sm:$0xf] %v51
  %v213 = vcombine.low %v50, %v50
  %v214 = vcombine.low %v51, %v51
  %215 = vrot.lane.b32.xlu0 %v213, 127
  %v216 = vpop.permute.xlu0 %215
  %217 = vrot.lane.b32.xlu0 %v50, 127
  %v218 = vpop.permute.xlu0 %217
  %219 = vrot.lane.b32.xlu0 %v214, 127
  %v220 = vpop.permute.xlu0 %219
  %221 = vrot.lane.b32.xlu0 %v51, 127
  %v222 = vpop.permute.xlu0 %221
  %v223 = vsel %vm69, %v216, %v218
  %v224 = vsel %vm69, %v218, %v220
  %v225 = vsel %vm69, %v220, %v222
  %229 = vst [vmem:[#allocation2 + $0x18] sm:$0xf0] %v223
  %230 = vst [vmem:[#allocation2 + $0x20] sm:$0xf0] %v224
  %231 = vst [vmem:[#allocation2 + $0x28] sm:$0xf0] %v225
  %v232 = vcombine.high %v51, %v51
  %233 = vrot.lane.b32.xlu0 %v50, 126
  %v234 = vpop.permute.xlu0 %233
  %235 = vrot.lane.b32.xlu0 %v208, 126
  %v236 = vpop.permute.xlu0 %235
  %237 = vrot.lane.b32.xlu0 %v51, 126
  %v238 = vpop.permute.xlu0 %237
  %239 = vrot.lane.b32.xlu0 %v232, 126
  %v240 = vpop.permute.xlu0 %239
  %v241 = vsel %vm88, %v234, %v236
  %v242 = vsel %vm88, %v236, %v238
  %v243 = vsel %vm88, %v238, %v240
  %247 = vst [vmem:[#allocation2 + $0x48] sm:$0xf] %v241
  %248 = vst [vmem:[#allocation2 + $0x50] sm:$0xf] %v242
  %249 = vst [vmem:[#allocation2 + $0x58] sm:$0xf] %v243
  %250 = vrot.lane.b32.xlu0 %v213, 110
  %v251 = vpop.permute.xlu0 %250
  %252 = vrot.lane.b32.xlu0 %v50, 110
  %v253 = vpop.permute.xlu0 %252
  %254 = vrot.lane.b32.xlu0 %v214, 110
  %v255 = vpop.permute.xlu0 %254
  %256 = vrot.lane.b32.xlu0 %v51, 110
  %v257 = vpop.permute.xlu0 %256
  %v258 = vsel %vm106, %v251, %v253
  %v259 = vsel %vm106, %v253, %v255
  %v260 = vsel %vm106, %v255, %v257
  %264 = vst [vmem:[#allocation2 + $0x48] sm:$0xf0] %v258
  %265 = vst [vmem:[#allocation2 + $0x50] sm:$0xf0] %v259
  %266 = vst [vmem:[#allocation2 + $0x58] sm:$0xf0] %v260
  %267 = vrot.lane.b32.xlu0 %v50, 109
  %v268 = vpop.permute.xlu0 %267
  %269 = vrot.lane.b32.xlu0 %v208, 109
  %v270 = vpop.permute.xlu0 %269
  %271 = vrot.lane.b32.xlu0 %v51, 109
  %v272 = vpop.permute.xlu0 %271
  %273 = vrot.lane.b32.xlu0 %v232, 109
  %v274 = vpop.permute.xlu0 %273
  %v275 = vsel %vm124, %v268, %v270
  %v276 = vsel %vm124, %v270, %v272
  %v277 = vsel %vm124, %v272, %v274
  %281 = vst [vmem:[#allocation2 + $0x78] sm:$0xf] %v275
  %282 = vst [vmem:[#allocation2 + $0x80] sm:$0xf] %v276
  %283 = vst [vmem:[#allocation2 + $0x88] sm:$0xf] %v277
  %284 = vrot.lane.b32.xlu0 %v213, 108
  %v285 = vpop.permute.xlu0 %284
  %286 = vrot.lane.b32.xlu0 %v50, 108
  %v287 = vpop.permute.xlu0 %286
  %288 = vrot.lane.b32.xlu0 %v214, 108
  %v289 = vpop.permute.xlu0 %288
  %290 = vrot.lane.b32.xlu0 %v51, 108
  %v291 = vpop.permute.xlu0 %290
  %v292 = vsel %vm142, %v285, %v287
  %v293 = vsel %vm142, %v287, %v289
  %v294 = vsel %vm142, %v289, %v291
  %298 = vst [vmem:[#allocation2 + $0x78] sm:$0xf0] %v292
  %299 = vst [vmem:[#allocation2 + $0x80] sm:$0xf0] %v293
  %300 = vst [vmem:[#allocation2 + $0x88] sm:$0xf0] %v294
  %301 = vrot.lane.b32.xlu0 %v50, 92
  %v302 = vpop.permute.xlu0 %301
  %303 = vrot.lane.b32.xlu0 %v208, 92
  %v304 = vpop.permute.xlu0 %303
  %305 = vrot.lane.b32.xlu0 %v51, 92
  %v306 = vpop.permute.xlu0 %305
  %307 = vrot.lane.b32.xlu0 %v232, 92
  %v308 = vpop.permute.xlu0 %307
  %v309 = vsel %vm160, %v302, %v304
  %v310 = vsel %vm160, %v304, %v306
  %v311 = vsel %vm160, %v306, %v308
  %315 = vst [vmem:[#allocation2 + $0xa8] sm:$0xf] %v309
  %316 = vst [vmem:[#allocation2 + $0xb0] sm:$0xf] %v310
  %317 = vst [vmem:[#allocation2 + $0xb8] sm:$0xf] %v311
  %318 = vrot.lane.b32.xlu0 %v213, 91
  %v319 = vpop.permute.xlu0 %318
  %320 = vrot.lane.b32.xlu0 %v50, 91
  %v321 = vpop.permute.xlu0 %320
  %322 = vrot.lane.b32.xlu0 %v214, 91
  %v323 = vpop.permute.xlu0 %322
  %324 = vrot.lane.b32.xlu0 %v51, 91
  %v325 = vpop.permute.xlu0 %324
  %v326 = vsel %vm178, %v319, %v321
  %v327 = vsel %vm178, %v321, %v323
  %v328 = vsel %vm178, %v323, %v325
  %332 = vst [vmem:[#allocation2 + $0xa8] sm:$0xf0] %v326
  %333 = vst [vmem:[#allocation2 + $0xb0] sm:$0xf0] %v327
  %334 = vst [vmem:[#allocation2 + $0xb8] sm:$0xf0] %v328
  %335 = vrot.lane.b32.xlu0 %v50, 90
  %v336 = vpop.permute.xlu0 %335
  %337 = vrot.lane.b32.xlu0 %v208, 90
  %v338 = vpop.permute.xlu0 %337
  %339 = vrot.lane.b32.xlu0 %v51, 90
  %v340 = vpop.permute.xlu0 %339
  %341 = vrot.lane.b32.xlu0 %v232, 90
  %v342 = vpop.permute.xlu0 %341
  %v343 = vsel %vm196, %v336, %v338
  %v344 = vsel %vm196, %v338, %v340
  %v345 = vsel %vm196, %v340, %v342
  %349 = vst [vmem:[#allocation2 + $0xd8] sm:$0xf] %v343
  %350 = vst [vmem:[#allocation2 + $0xe0] sm:$0xf] %v344
  %351 = vst [vmem:[#allocation2 + $0xe8] sm:$0xf] %v345
  %v352 = vld [vmem:[%s1] sm:$0xff]
  %v353 = vld [vmem:[#allocation2] sm:$0xff]
  %v354 = vld [vmem:[#allocation2 + $0x8] sm:$0xff]
  %v355 = vld [vmem:[#allocation2 + $0x10] sm:$0xff]
  %v356 = vld [vmem:[#allocation2 + $0x18] sm:$0xff]
  %v357 = vld [vmem:[#allocation2 + $0x20] sm:$0xff]
  %v358 = vld [vmem:[#allocation2 + $0x28] sm:$0xff]
  %v359 = vld [vmem:[#allocation2 + $0x30] sm:$0xff]
  %v360 = vld [vmem:[#allocation2 + $0x38] sm:$0xff]
  %v361 = vld [vmem:[#allocation2 + $0x40] sm:$0xff]
  %v362 = vld [vmem:[#allocation2 + $0x48] sm:$0xff]
  %v363 = vld [vmem:[#allocation2 + $0x50] sm:$0xff]
  %v364 = vld [vmem:[#allocation2 + $0x58] sm:$0xff]
  %v365 = vld [vmem:[#allocation2 + $0x60] sm:$0xff]
  %v366 = vld [vmem:[#allocation2 + $0x68] sm:$0xff]
  %v367 = vld [vmem:[#allocation2 + $0x70] sm:$0xff]
  %v368 = vld [vmem:[#allocation2 + $0x78] sm:$0xff]
  %v369 = vld [vmem:[#allocation2 + $0x80] sm:$0xff]
  %v370 = vld [vmem:[#allocation2 + $0x88] sm:$0xff]
  %v371 = vld [vmem:[#allocation2 + $0x90] sm:$0xff]
  %v372 = vld [vmem:[#allocation2 + $0x98] sm:$0xff]
  %v373 = vld [vmem:[#allocation2 + $0xa0] sm:$0xff]
  %v374 = vld [vmem:[#allocation2 + $0xa8] sm:$0xff]
  %v375 = vld [vmem:[#allocation2 + $0xb0] sm:$0xff]
  %v376 = vld [vmem:[#allocation2 + $0xb8] sm:$0xff]
  %v377 = vld [vmem:[#allocation2 + $0xc0] sm:$0xff]
  %v378 = vld [vmem:[#allocation2 + $0xc8] sm:$0xff]
  %v379 = vld [vmem:[#allocation2 + $0xd0] sm:$0xff]
  %v380 = vld [vmem:[#allocation2 + $0xd8] sm:$0xff]
  %v381 = vld [vmem:[#allocation2 + $0xe0] sm:$0xff]
  %v382 = vld [vmem:[#allocation2 + $0xe8] sm:$0xff]
  %vm383 = vcmask 326656
  %v385 = vsel %vm383, %v352, 0
  %387 = vmatprep.subr.mxu0 %v354
  %388 = vmatpush1.msra.mxu0 %v353
  %389 = vmatprep.subr.mxu0 %v360
  %390 = vmatpush1.msra.mxu0 %v359
  %391 = vmatprep.subr.mxu0 %v366
  %392 = vmatpush1.msra.mxu0 %v365
  %393 = vmatprep.subr.mxu0 %v372
  %394 = vmatpush1.msra.mxu0 %v371
  %395 = vmatprep.subr.mxu0 %v378
  %396 = vmatpush1.msra.mxu0 %v377
  %397 = vmatprep.subr.mxu0 0.0
  %398 = vmatpush1.msra.mxu0 0.0
  %399 = vmatprep.subr.mxu0 0.0
  %400 = vmatpush1.msra.mxu0 0.0
  %401 = vmatprep.subr.mxu0 0.0
  %402 = vmatpush1.msra.mxu0 0.0
  %403 = vmatprep.subr.mxu0 0.0
  %404 = vmatpush1.msra.mxu0 0.0
  %405 = vmatprep.subr.mxu0 0.0
  %406 = vmatpush1.msra.mxu0 0.0
  %407 = vmatprep.subr.mxu0 0.0
  %408 = vmatpush1.msra.mxu0 0.0
  %409 = vmatprep.subr.mxu0 0.0
  %410 = vmatpush1.msra.mxu0 0.0
  %411 = vmatprep.subr.mxu0 0.0
  %412 = vmatpush1.msra.mxu0 0.0
  %413 = vmatprep.subr.mxu0 0.0
  %414 = vmatpush1.msra.mxu0 0.0
  %415 = vmatprep.subr.mxu0 0.0
  %416 = vmatpush1.msra.mxu0 0.0
  %417 = vmatprep.subr.mxu0 0.0
  %418 = vmatpush1.msra.mxu0 0.0
  %419 = vmatprep.subr.mxu0 0.0
  %420 = vmatpush1.msra.mxu0 0.0
  %421 = vmatprep.subr.mxu0 0.0
  %422 = vmatpush1.msra.mxu0 0.0
  %423 = vmatprep.subr.mxu0 0.0
  %424 = vmatpush1.msra.mxu0 0.0
  %425 = vmatprep.subr.mxu0 0.0
  %426 = vmatpush1.msra.mxu0 0.0
  %427 = vmatprep.subr.mxu0 0.0
  %428 = vmatpush1.msra.mxu0 0.0
  %429 = vmatprep.subr.mxu0 0.0
  %430 = vmatpush1.msra.mxu0 0.0
  %431 = vmatprep.subr.mxu0 0.0
  %432 = vmatpush1.msra.mxu0 0.0
  %433 = vmatprep.subr.mxu0 0.0
  %434 = vmatpush1.msra.mxu0 0.0
  %435 = vmatprep.subr.mxu0 0.0
  %436 = vmatpush1.msra.mxu0 0.0
  %437 = vmatprep.subr.mxu0 0.0
  %438 = vmatpush1.msra.mxu0 0.0
  %439 = vmatprep.subr.mxu0 0.0
  %440 = vmatpush1.msra.mxu0 0.0
  %441 = vmatprep.subr.mxu0 0.0
  %442 = vmatpush1.msra.mxu0 0.0
  %443 = vmatprep.subr.mxu0 0.0
  %444 = vmatpush1.msra.mxu0 0.0
  %445 = vmatprep.subr.mxu0 0.0
  %446 = vmatpush1.msra.mxu0 0.0
  %447 = vmatprep.subr.mxu0 0.0
  %448 = vmatpush1.msra.mxu0 0.0
  %449 = vmatprep.subr.mxu0 0.0
  %450 = vmatpush1.msra.mxu0 0.0
  %451 = vmatprep.mubr.f32.mxu0 0.0
  %452 = vmatmul.mubr.f32.gmra.mrb[0].mxu0 %v385
  %v453 = vpop.f32.mrb[0].mxu0
  %v454 = vadd.f32 0.0, %v453
  %v455 = vpop.f32.mrb[0].mxu0
  %v456 = vadd.f32 0.0, %v455
  %457 = vdwg.mxu0
  %458 = vmatprep.subr.mxu0 %v356
  %459 = vmatpush1.msra.mxu0 %v355
  %460 = vmatprep.subr.mxu0 %v362
  %461 = vmatpush1.msra.mxu0 %v361
  %462 = vmatprep.subr.mxu0 %v368
  %463 = vmatpush1.msra.mxu0 %v367
  %464 = vmatprep.subr.mxu0 %v374
  %465 = vmatpush1.msra.mxu0 %v373
  %466 = vmatprep.subr.mxu0 %v380
  %467 = vmatpush1.msra.mxu0 %v379
  %468 = vmatprep.subr.mxu0 0.0
  %469 = vmatpush1.msra.mxu0 0.0
  %470 = vmatprep.subr.mxu0 0.0
  %471 = vmatpush1.msra.mxu0 0.0
  %472 = vmatprep.subr.mxu0 0.0
  %473 = vmatpush1.msra.mxu0 0.0
  %474 = vmatprep.subr.mxu0 0.0
  %475 = vmatpush1.msra.mxu0 0.0
  %476 = vmatprep.subr.mxu0 0.0
  %477 = vmatpush1.msra.mxu0 0.0
  %478 = vmatprep.subr.mxu0 0.0
  %479 = vmatpush1.msra.mxu0 0.0
  %480 = vmatprep.subr.mxu0 0.0
  %481 = vmatpush1.msra.mxu0 0.0
  %482 = vmatprep.subr.mxu0 0.0
  %483 = vmatpush1.msra.mxu0 0.0
  %484 = vmatprep.subr.mxu0 0.0
  %485 = vmatpush1.msra.mxu0 0.0
  %486 = vmatprep.subr.mxu0 0.0
  %487 = vmatpush1.msra.mxu0 0.0
  %488 = vmatprep.subr.mxu0 0.0
  %489 = vmatpush1.msra.mxu0 0.0
  %490 = vmatprep.subr.mxu0 0.0
  %491 = vmatpush1.msra.mxu0 0.0
  %492 = vmatprep.subr.mxu0 0.0
  %493 = vmatpush1.msra.mxu0 0.0
  %494 = vmatprep.subr.mxu0 0.0
  %495 = vmatpush1.msra.mxu0 0.0
  %496 = vmatprep.subr.mxu0 0.0
  %497 = vmatpush1.msra.mxu0 0.0
  %498 = vmatprep.subr.mxu0 0.0
  %499 = vmatpush1.msra.mxu0 0.0
  %500 = vmatprep.subr.mxu0 0.0
  %501 = vmatpush1.msra.mxu0 0.0
  %502 = vmatprep.subr.mxu0 0.0
  %503 = vmatpush1.msra.mxu0 0.0
  %504 = vmatprep.subr.mxu0 0.0
  %505 = vmatpush1.msra.mxu0 0.0
  %506 = vmatprep.subr.mxu0 0.0
  %507 = vmatpush1.msra.mxu0 0.0
  %508 = vmatprep.subr.mxu0 0.0
  %509 = vmatpush1.msra.mxu0 0.0
  %510 = vmatprep.subr.mxu0 0.0
  %511 = vmatpush1.msra.mxu0 0.0
  %512 = vmatprep.subr.mxu0 0.0
  %513 = vmatpush1.msra.mxu0 0.0
  %514 = vmatprep.subr.mxu0 0.0
  %515 = vmatpush1.msra.mxu0 0.0
  %516 = vmatprep.subr.mxu0 0.0
  %517 = vmatpush1.msra.mxu0 0.0
  %518 = vmatprep.subr.mxu0 0.0
  %519 = vmatpush1.msra.mxu0 0.0
  %520 = vmatprep.subr.mxu0 0.0
  %521 = vmatpush1.msra.mxu0 0.0
  %522 = vmatprep.mubr.f32.mxu0 0.0
  %523 = vmatmul.mubr.f32.gmra.mrb[0].mxu0 %v385
  %v524 = vpop.f32.mrb[0].mxu0
  %v525 = vadd.f32 0.0, %v524
  %v526 = vpop.f32.mrb[0].mxu0
  %v527 = vadd.f32 0.0, %v526
  %528 = vdwg.mxu0
  %529 = vmatprep.subr.mxu0 %v358
  %530 = vmatpush1.msra.mxu0 %v357
  %531 = vmatprep.subr.mxu0 %v364
  %532 = vmatpush1.msra.mxu0 %v363
  %533 = vmatprep.subr.mxu0 %v370
  %534 = vmatpush1.msra.mxu0 %v369
  %535 = vmatprep.subr.mxu0 %v376
  %536 = vmatpush1.msra.mxu0 %v375
  %537 = vmatprep.subr.mxu0 %v382
  %538 = vmatpush1.msra.mxu0 %v381
  %539 = vmatprep.subr.mxu0 0.0
  %540 = vmatpush1.msra.mxu0 0.0
  %541 = vmatprep.subr.mxu0 0.0
  %542 = vmatpush1.msra.mxu0 0.0
  %543 = vmatprep.subr.mxu0 0.0
  %544 = vmatpush1.msra.mxu0 0.0
  %545 = vmatprep.subr.mxu0 0.0
  %546 = vmatpush1.msra.mxu0 0.0
  %547 = vmatprep.subr.mxu0 0.0
  %548 = vmatpush1.msra.mxu0 0.0
  %549 = vmatprep.subr.mxu0 0.0
  %550 = vmatpush1.msra.mxu0 0.0
  %551 = vmatprep.subr.mxu0 0.0
  %552 = vmatpush1.msra.mxu0 0.0
  %553 = vmatprep.subr.mxu0 0.0
  %554 = vmatpush1.msra.mxu0 0.0
  %555 = vmatprep.subr.mxu0 0.0
  %556 = vmatpush1.msra.mxu0 0.0
  %557 = vmatprep.subr.mxu0 0.0
  %558 = vmatpush1.msra.mxu0 0.0
  %559 = vmatprep.subr.mxu0 0.0
  %560 = vmatpush1.msra.mxu0 0.0
  %561 = vmatprep.subr.mxu0 0.0
  %562 = vmatpush1.msra.mxu0 0.0
  %563 = vmatprep.subr.mxu0 0.0
  %564 = vmatpush1.msra.mxu0 0.0
  %565 = vmatprep.subr.mxu0 0.0
  %566 = vmatpush1.msra.mxu0 0.0
  %567 = vmatprep.subr.mxu0 0.0
  %568 = vmatpush1.msra.mxu0 0.0
  %569 = vmatprep.subr.mxu0 0.0
  %570 = vmatpush1.msra.mxu0 0.0
  %571 = vmatprep.subr.mxu0 0.0
  %572 = vmatpush1.msra.mxu0 0.0
  %573 = vmatprep.subr.mxu0 0.0
  %574 = vmatpush1.msra.mxu0 0.0
  %575 = vmatprep.subr.mxu0 0.0
  %576 = vmatpush1.msra.mxu0 0.0
  %577 = vmatprep.subr.mxu0 0.0
  %578 = vmatpush1.msra.mxu0 0.0
  %579 = vmatprep.subr.mxu0 0.0
  %580 = vmatpush1.msra.mxu0 0.0
  %581 = vmatprep.subr.mxu0 0.0
  %582 = vmatpush1.msra.mxu0 0.0
  %583 = vmatprep.subr.mxu0 0.0
  %584 = vmatpush1.msra.mxu0 0.0
  %585 = vmatprep.subr.mxu0 0.0
  %586 = vmatpush1.msra.mxu0 0.0
  %587 = vmatprep.subr.mxu0 0.0
  %588 = vmatpush1.msra.mxu0 0.0
  %589 = vmatprep.subr.mxu0 0.0
  %590 = vmatpush1.msra.mxu0 0.0
  %591 = vmatprep.subr.mxu0 0.0
  %592 = vmatpush1.msra.mxu0 0.0
  %593 = vmatprep.mubr.f32.mxu0 0.0
  %594 = vmatmul.mubr.f32.gmra.mrb[0].mxu0 %v385
  %v595 = vpop.f32.mrb[0].mxu0
  %v596 = vadd.f32 0.0, %v595
  %v597 = vpop.f32.mrb[0].mxu0
  %v598 = vadd.f32 0.0, %v597
  %599 = vdwg.mxu0
  %v600 = vmax.f32 %v454, 0.0
  %v601 = vmax.f32 %v456, 0.0
  %v602 = vmax.f32 %v525, 0.0
  %v603 = vmax.f32 %v527, 0.0
  %v604 = vmax.f32 %v596, 0.0
  %v605 = vmax.f32 %v598, 0.0
  %606 = vst [vmem:[%s2] sm:$0xff] %v600
  %607 = vst [vmem:[%s2 + $0x8] sm:$0xff] %v601
  %608 = vst [vmem:[%s2 + $0x10] sm:$0xff] %v602
  %609 = vst [vmem:[%s2 + $0x18] sm:$0xff] %v603
  %610 = vst [vmem:[%s2 + $0x20] sm:$0xff] %v604
  %611 = vst [vmem:[%s2 + $0x28] sm:$0xff] %v605
  // Predicated region
  $region10: #{conv2d_relu_pallas.1} parent=0 // pred_check
    _
  $region11: #{conv2d_relu_pallas.1} parent=0 // pred_check_branch
    %613 = sbr.rel (0) target = $region13
  $region12: #{conv2d_relu_pallas.1} parent=0 // pred_region
    _
  $region13: #{conv2d_relu_pallas.1} parent=0 // pred_fallthru
    _
  // Predicated region
  $region14: #{conv2d_relu_pallas.1} parent=0 // pred_check
    _
  $region15: #{conv2d_relu_pallas.1} parent=0 // pred_check_branch
    %615 = sbr.rel (0) target = $region17
  $region16: #{conv2d_relu_pallas.1} parent=0 // pred_region
    _
  $region17: #{conv2d_relu_pallas.1} parent=0 // pred_fallthru
    _

</llo_original>
